<compile_context>
chip_gen: v6e
topology: v6e:2x2x1
jax: 0.10.0
libtpu: 0.0.40
codegen_flags: <defaults>
</compile_context>

<pallas_src>
import jax
import jax.numpy as jnp
from jax.experimental import pallas as pl
from jax.experimental.pallas import tpu as pltpu

BN_EPS = 1e-5
LANE = 128


def _round_up(n, m):
    return ((n + m - 1) // m) * m


def _default_col_splits():
    """2-way column split only on v7x (2 TensorCores/chip); single block on
    v5e/v6e (one TC -> extra grid steps are pure overhead at these sizes)."""
    try:
        kind = jax.devices()[0].device_kind.lower()
    except Exception:
        return 1
    return 2 if "v7" in kind else 1


def gate_kernel(x_ref, w1_ref, gb_ref, w2_ref, b2_ref, out_ref):
    """One grid step computes the full hidden h (N, Gp) + batch-norm stats and
    one column block of linear2's output.

    linear1's bias is intentionally omitted: training-mode BatchNorm subtracts
    the batch mean, so b1 cancels exactly.
    """
    # ---- linear1 on the MXU: bf16 operands, f32 accumulation (single pass) ----
    h = jnp.dot(x_ref[...].astype(jnp.bfloat16), w1_ref[...],
                preferred_element_type=jnp.float32)            # (N, Gp) f32

    # ---- BatchNorm1d (training-mode batch stats), all math in f32 ----
    # One-pass variance E[h^2] - mean^2; clamped at 0 to guard cancellation
    # when |mean| >> std (fine for this init; revisit for extreme weights).
    inv_n = 1.0 / h.shape[0]
    mean = jnp.sum(h, axis=0, keepdims=True) * inv_n            # (1, Gp)
    ex2 = jnp.sum(h * h, axis=0, keepdims=True) * inv_n         # (1, Gp)
    var = jnp.maximum(ex2 - mean * mean, 0.0)

    g = gb_ref[...]                                             # single (2, Gp) load
    gamma = g[0:1, :]
    beta = g[1:2, :]

    scale = gamma * jax.lax.rsqrt(var + BN_EPS)                 # rsqrt -> EUP slot
    shift = beta - mean * scale

    # ---- fused normalize + affine + ReLU (single FMA pass over h) ----
    h_relu = jnp.maximum(h * scale + shift, 0.0)

    # ---- linear2 column block: bf16 operands, f32 accumulation ----
    out_ref[...] = (jnp.dot(h_relu.astype(jnp.bfloat16), w2_ref[...],
                            preferred_element_type=jnp.float32)
                    + b2_ref[...]).astype(out_ref.dtype)


def prepare_params(params, col_splits=None):
    """Pad gate_dim to a multiple of col_splits*128 (lane-dense blocks even
    when linear2's columns are split), cast the big weights to bf16, and pack
    gamma/beta into one (2, Gp) f32 array.  Padded columns are zero, so padded
    output lanes stay zero and are sliced off outside the kernel."""
    if col_splits is None:
        col_splits = _default_col_splits()
    gate_dim = params["w1"].shape[1]
    gp = _round_up(gate_dim, col_splits * LANE)
    pad_g = gp - gate_dim
    w1 = jnp.pad(params["w1"], ((0, 0), (0, pad_g))).astype(jnp.bfloat16)
    w2 = jnp.pad(params["w2"], ((0, pad_g), (0, pad_g))).astype(jnp.bfloat16)
    gb = jnp.pad(jnp.concatenate([params["gamma"], params["beta"]], axis=0),
                 ((0, 0), (0, pad_g)))                          # (2, Gp) f32
    b2 = jnp.pad(params["b2"], ((0, 0), (0, pad_g)))            # (1, Gp) f32
    return {"w1": w1, "w2": w2, "gb": gb, "b2": b2,
            "gate_dim": gate_dim, "col_splits": col_splits}


def gate_forward(x, packed):
    """x: (N, emb_dim) f32.  packed: output of prepare_params."""
    n, emb_dim = x.shape
    gate_dim = packed["gate_dim"]
    col_splits = packed["col_splits"]
    w1, w2, gb, b2 = packed["w1"], packed["w2"], packed["gb"], packed["b2"]
    gp = w1.shape[1]
    assert gp % (col_splits * LANE) == 0
    gp_blk = gp // col_splits

    flops = 2 * n * emb_dim * gp + 2 * n * gp * gp + 8 * n * gp
    bytes_accessed = (x.nbytes + w1.nbytes + w2.nbytes + gb.nbytes + b2.nbytes
                      + 4 * n * gp)
    cost = pl.CostEstimate(flops=flops,
                           transcendentals=gp,
                           bytes_accessed=bytes_accessed)

    out_padded = pl.pallas_call(
        gate_kernel,
        out_shape=jax.ShapeDtypeStruct((n, gp), jnp.float32),
        grid_spec=pltpu.PrefetchScalarGridSpec(
            num_scalar_prefetch=0,
            grid=(col_splits,),
            in_specs=[
                pl.BlockSpec((n, emb_dim), lambda j: (0, 0)),    # x (full, resident)
                pl.BlockSpec((emb_dim, gp), lambda j: (0, 0)),   # w1 bf16 (full)
                pl.BlockSpec((2, gp), lambda j: (0, 0)),         # gamma/beta f32
                pl.BlockSpec((gp, gp_blk), lambda j: (0, j)),    # w2 bf16 column block
                pl.BlockSpec((1, gp_blk), lambda j: (0, j)),     # b2 column block
            ],
            out_specs=pl.BlockSpec((n, gp_blk), lambda j: (0, j)),
        ),
        compiler_params=pltpu.CompilerParams(
            dimension_semantics=("parallel",)),
        cost_estimate=cost,
    )(x, w1, gb, w2, b2)

    return out_padded[:, :gate_dim]


def init_params(key, emb_dim, gate_dim):
    """Deterministic init mimicking nn.Linear's uniform(-1/sqrt(fan_in), +).
    b1 is kept for parity with nn.Linear (used by the reference) but is
    mathematically dead under training-mode BatchNorm, so the kernel skips it."""
    k1, k2, k3, k4 = jax.random.split(key, 4)
    bound1 = 1.0 / (emb_dim ** 0.5)
    bound2 = 1.0 / (gate_dim ** 0.5)
    return {
        # stored pre-transposed: (in, out)
        "w1": jax.random.uniform(k1, (emb_dim, gate_dim), jnp.float32,
                                 -bound1, bound1),
        "b1": jax.random.uniform(k2, (1, gate_dim), jnp.float32,
                                 -bound1, bound1),
        "gamma": jnp.ones((1, gate_dim), jnp.float32),   # BatchNorm1d weight
        "beta": jnp.zeros((1, gate_dim), jnp.float32),   # BatchNorm1d bias
        "w2": jax.random.uniform(k3, (gate_dim, gate_dim), jnp.float32,
                                 -bound2, bound2),
        "b2": jax.random.uniform(k4, (1, gate_dim), jnp.float32,
                                 -bound2, bound2),
    }


def gate_reference(x, params):
    """Pure-JAX f32 reference of the PyTorch forward (training-mode batchnorm),
    including the linear1 bias that BN cancels."""
    h = x @ params["w1"] + params["b1"]
    mean = jnp.mean(h, axis=0, keepdims=True)
    var = jnp.mean((h - mean) ** 2, axis=0, keepdims=True)
    h = (h - mean) / jnp.sqrt(var + BN_EPS)
    h = h * params["gamma"] + params["beta"]
    h = jnp.maximum(h, 0.0)
    return h @ params["w2"] + params["b2"]


if __name__ == "__main__":
    emb_dim, gate_dim, batch = 32, 300, 8

    key = jax.random.PRNGKey(0)
    kx, kp = jax.random.split(key)
    x = jax.random.normal(kx, (batch, emb_dim), jnp.float32)
    params = init_params(kp, emb_dim, gate_dim)
    packed = prepare_params(params)

    out = gate_forward(x, packed)
    out = jax.block_until_ready(out)

    ref = gate_reference(x, params)
    assert out.shape == (batch, gate_dim)
    # bf16 matmul operands (f32 accumulation) vs a pure-f32 reference:
    # tolerance widened accordingly (observed error is O(1e-3)).
    err = float(jnp.max(jnp.abs(out - ref)))
    assert jnp.allclose(out, ref, atol=2e-2, rtol=2e-2), f"max abs err {err}"

    print("KERNEL_OK")
</pallas_src>

<mosaic_0001>
module attributes {stable_mosaic.version = 11 : i64} {
  func.func @gate_kernel(%arg0: i32, %arg1: memref<8x32xf32, #tpu.memory_space<vmem>>, %arg2: memref<32x384xbf16, #tpu.memory_space<vmem>>, %arg3: memref<2x384xf32, #tpu.memory_space<vmem>>, %arg4: memref<384x384xbf16, #tpu.memory_space<vmem>>, %arg5: memref<1x384xf32, #tpu.memory_space<vmem>>, %arg6: memref<8x384xf32, #tpu.memory_space<vmem>>) attributes {dimension_semantics = [#tpu.dimension_semantics<parallel>], iteration_bounds = array<i64: 1>, scalar_prefetch = 0 : i64, scratch_operands = 0 : i64, tpu.core_type = #tpu.core_type<tc>, window_params = [{pipeline_mode = #tpu.pipeline_mode<synchronous>, transform_indices = @transform_0, window_bounds = array<i64: 8, 32>}, {pipeline_mode = #tpu.pipeline_mode<synchronous>, transform_indices = @transform_1, window_bounds = array<i64: 32, 384>}, {pipeline_mode = #tpu.pipeline_mode<synchronous>, transform_indices = @transform_2, window_bounds = array<i64: 2, 384>}, {transform_indices = @transform_3, window_bounds = array<i64: 384, 384>}, {transform_indices = @transform_4, window_bounds = array<i64: 1, 384>}, {transform_indices = @transform_5, window_bounds = array<i64: 8, 384>}]} {
    %c0 = arith.constant 0 : index
    %c0_0 = arith.constant 0 : index
    %0 = vector.load %arg1[%c0, %c0_0] : memref<8x32xf32, #tpu.memory_space<vmem>>, vector<8x32xf32>
    %1 = arith.truncf %0 : vector<8x32xf32> to vector<8x32xbf16>
    %c0_1 = arith.constant 0 : index
    %c0_2 = arith.constant 0 : index
    %2 = vector.load %arg2[%c0_1, %c0_2] : memref<32x384xbf16, #tpu.memory_space<vmem>>, vector<32x384xbf16>
    %cst = arith.constant dense<0.000000e+00> : vector<8x384xf32>
    %3 = tpu.matmul %1, %2, %cst {dimension_numbers = #tpu.dot_dimension_numbers<[1], [0], [0], [1], [0, 0, 1, 1], [], []>} : vector<8x32xbf16>, vector<32x384xbf16>, vector<8x384xf32> -> vector<8x384xf32>
    %cst_3 = arith.constant dense<0.000000e+00> : vector<384xf32>
    %4 = vector.multi_reduction <add>, %3, %cst_3 [0] : vector<8x384xf32> to vector<384xf32>
    %5 = vector.shape_cast %4 : vector<384xf32> to vector<1x384xf32>
    %cst_4 = arith.constant 1.250000e-01 : f32
    %6 = vector.broadcast %cst_4 : f32 to vector<1x384xf32>
    %7 = arith.mulf %5, %6 : vector<1x384xf32>
    %8 = arith.mulf %3, %3 : vector<8x384xf32>
    %cst_5 = arith.constant dense<0.000000e+00> : vector<384xf32>
    %9 = vector.multi_reduction <add>, %8, %cst_5 [0] : vector<8x384xf32> to vector<384xf32>
    %10 = vector.shape_cast %9 : vector<384xf32> to vector<1x384xf32>
    %cst_6 = arith.constant 1.250000e-01 : f32
    %11 = vector.broadcast %cst_6 : f32 to vector<1x384xf32>
    %12 = arith.mulf %10, %11 : vector<1x384xf32>
    %13 = arith.mulf %7, %7 : vector<1x384xf32>
    %14 = arith.subf %12, %13 : vector<1x384xf32>
    %cst_7 = arith.constant 0.000000e+00 : f32
    %15 = vector.broadcast %cst_7 : f32 to vector<1x384xf32>
    %16 = arith.maximumf %14, %15 : vector<1x384xf32>
    %c0_8 = arith.constant 0 : index
    %c0_9 = arith.constant 0 : index
    %17 = vector.load %arg3[%c0_8, %c0_9] : memref<2x384xf32, #tpu.memory_space<vmem>>, vector<2x384xf32>
    %18 = vector.extract_strided_slice %17 {offsets = [0, 0], sizes = [1, 384], strides = [1, 1]} : vector<2x384xf32> to vector<1x384xf32>
    %19 = vector.extract_strided_slice %17 {offsets = [1, 0], sizes = [1, 384], strides = [1, 1]} : vector<2x384xf32> to vector<1x384xf32>
    %cst_10 = arith.constant 9.99999974E-6 : f32
    %20 = vector.broadcast %cst_10 : f32 to vector<1x384xf32>
    %21 = arith.addf %16, %20 : vector<1x384xf32>
    %22 = math.rsqrt %21 : vector<1x384xf32>
    %23 = arith.mulf %18, %22 : vector<1x384xf32>
    %24 = arith.mulf %7, %23 : vector<1x384xf32>
    %25 = arith.subf %19, %24 : vector<1x384xf32>
    %26 = vector.broadcast %23 : vector<1x384xf32> to vector<8x384xf32>
    %27 = arith.mulf %3, %26 : vector<8x384xf32>
    %28 = vector.broadcast %25 : vector<1x384xf32> to vector<8x384xf32>
    %29 = arith.addf %27, %28 : vector<8x384xf32>
    %cst_11 = arith.constant 0.000000e+00 : f32
    %30 = vector.broadcast %cst_11 : f32 to vector<8x384xf32>
    %31 = arith.maximumf %29, %30 : vector<8x384xf32>
    %32 = arith.truncf %31 : vector<8x384xf32> to vector<8x384xbf16>
    %c0_12 = arith.constant 0 : index
    %c0_13 = arith.constant 0 : index
    %33 = vector.load %arg4[%c0_12, %c0_13] : memref<384x384xbf16, #tpu.memory_space<vmem>>, vector<384x384xbf16>
    %cst_14 = arith.constant dense<0.000000e+00> : vector<8x384xf32>
    %34 = tpu.matmul %32, %33, %cst_14 {dimension_numbers = #tpu.dot_dimension_numbers<[1], [0], [0], [1], [0, 0, 1, 1], [], []>} : vector<8x384xbf16>, vector<384x384xbf16>, vector<8x384xf32> -> vector<8x384xf32>
    %c0_15 = arith.constant 0 : index
    %c0_16 = arith.constant 0 : index
    %35 = vector.load %arg5[%c0_15, %c0_16] : memref<1x384xf32, #tpu.memory_space<vmem>>, vector<1x384xf32>
    %36 = vector.broadcast %35 : vector<1x384xf32> to vector<8x384xf32>
    %37 = arith.addf %34, %36 : vector<8x384xf32>
    %c0_17 = arith.constant 0 : index
    %c0_18 = arith.constant 0 : index
    %38 = vector.load %arg6[%c0_17, %c0_18] : memref<8x384xf32, #tpu.memory_space<vmem>>, vector<8x384xf32>
    tpu.vector_store %arg6[%c0_17, %c0_18], %37 {strides = array<i32>} : memref<8x384xf32, #tpu.memory_space<vmem>>, vector<8x384xf32>,
    return
  }
  func.func @transform_0(%arg0: i32) -> (i32, i32) {
    %c0_i32 = arith.constant 0 : i32
    %c0_i32_0 = arith.constant 0 : i32
    %c0_i32_1 = arith.constant 0 : i32
    return %c0_i32, %c0_i32_0 : i32, i32
  }
  func.func @transform_1(%arg0: i32) -> (i32, i32) {
    %c0_i32 = arith.constant 0 : i32
    %c0_i32_0 = arith.constant 0 : i32
    %c0_i32_1 = arith.constant 0 : i32
    return %c0_i32, %c0_i32_0 : i32, i32
  }
  func.func @transform_2(%arg0: i32) -> (i32, i32) {
    %c0_i32 = arith.constant 0 : i32
    %c0_i32_0 = arith.constant 0 : i32
    %c0_i32_1 = arith.constant 0 : i32
    return %c0_i32, %c0_i32_0 : i32, i32
  }
  func.func @transform_3(%arg0: i32) -> (i32, i32) {
    %c0_i32 = arith.constant 0 : i32
    %c0_i32_0 = arith.constant 0 : i32
    return %c0_i32, %arg0 : i32, i32
  }
  func.func @transform_4(%arg0: i32) -> (i32, i32) {
    %c0_i32 = arith.constant 0 : i32
    %c0_i32_0 = arith.constant 0 : i32
    return %c0_i32, %arg0 : i32, i32
  }
  func.func @transform_5(%arg0: i32) -> (i32, i32) {
    %c0_i32 = arith.constant 0 : i32
    %c0_i32_0 = arith.constant 0 : i32
    return %c0_i32, %arg0 : i32, i32
  }
}

</mosaic_0001>

<llo_original>
// kernel: tpu_custom_call.1
$region0: #{tpu_custom_call.1}
  #allocation0 [shape = 'u32[]', space=smem, size = 0x4, offset = 0x4, fixed_abs, tag = 'smem constant byte address 0x4 - core index']
  #allocation1 [shape = 'u32[144,128]{1,0:T(1,128)}', space=vmem, size = 0x12000, scoped, tag = 'internal scratch']
  %s0 = inlined_call_operand.hbm [shape: f32[8,32], index: 0, kind: input, shape index: {}]
  %s1 = inlined_call_operand.hbm [shape: bf16[32,384], index: 1, kind: input, shape index: {}]
  %s2 = inlined_call_operand.hbm [shape: f32[2,384], index: 2, kind: input, shape index: {}]
  %s3 = inlined_call_operand.hbm [shape: bf16[384,384], index: 3, kind: input, shape index: {}]
  %s4 = inlined_call_operand.vmem [shape: f32[1,384], index: 4, kind: input, shape index: {}]
  %s5 = inlined_call_operand.hbm [shape: f32[8,384], index: 5, kind: output, shape index: {}]
  %s6 = sld [smem:[#allocation0]]
  $region46: #{tpu_custom_call.1} parent=0
    _
  %s8 = ssub.s32 1, %s6
  %s9 = scalar_select 0, %s8, %s6
  $region1: #{tpu_custom_call.1} parent=0
    #allocation2 [shape = 'u8[4096]{0}', space=vmem, size = 0x1000, scoped, tag = 'input window, operand 0, single buffered']
    #allocation3 [shape = 's32[1]{0}', space=sflag, size = 0x4, scoped, tag = 'scoped memory for tpu_custom_call.1']
    #allocation4 [shape = 's32[1]{0}', space=sflag, size = 0x4, scoped, tag = 'scoped memory for tpu_custom_call.1']
    #allocation5 [shape = 'u8[24576]{0}', space=vmem, size = 0x6000, scoped, tag = 'input window, operand 1, single buffered']
    #allocation6 [shape = 's32[1]{0}', space=sflag, size = 0x4, scoped, tag = 'scoped memory for tpu_custom_call.1']
    #allocation7 [shape = 'u8[3072]{0}', space=vmem, size = 0xc00, scoped, tag = 'input window, operand 2, single buffered']
    #allocation8 [shape = 'u8[294912]{0}', space=vmem, size = 0x48000, scoped, tag = 'input window, operand 3, single buffered']
    #allocation9 [shape = 's32[1]{0}', space=sflag, size = 0x4, scoped, tag = 'scoped memory for tpu_custom_call.1']
    #allocation10 [shape = 'u8[12288]{0}', space=vmem, size = 0x3000, scoped, tag = 'output window, operand 0, single buffered']
    %10 = vsyncpa [#allocation3], 0
    %11 = vsyncpa [#allocation6], 0
    %12 = vsyncpa [#allocation9], 0
    %13 = vsyncpa [#allocation4], 0
    // Predicated region
    $region2: #{tpu_custom_call.1} parent=1 // pred_check
      _
    $region3: #{tpu_custom_call.1} parent=1 // pred_check_branch
      %15 = sbr.rel (0) target = $region5
    $region4: #{tpu_custom_call.1} parent=1 // pred_region
      %s17 = ssub.s32 128, 128
      %18 = vsyncadd [#allocation3], %s17
      %s20 = sshll.u32 [#allocation2], 4
      %s21 = int_to_ptr.vmem [resolvable:$true] %s20
      %23 = dma.hbm_to_vmem [thread:$0]  %s0, 128, %s21, [#allocation3]
    $region5: #{tpu_custom_call.1} parent=1 // pred_fallthru
      _
    // Predicated region
    $region6: #{tpu_custom_call.1} parent=1 // pred_check
      _
    $region7: #{tpu_custom_call.1} parent=1 // pred_check_branch
      %25 = sbr.rel (0) target = $region9
    $region8: #{tpu_custom_call.1} parent=1 // pred_region
      %s27 = ssub.s32 768, 768
      %28 = vsyncadd [#allocation6], %s27
      %s29 = sshll.u32 [#allocation5], 4
      %s30 = int_to_ptr.vmem [resolvable:$true] %s29
      %35 = dma.hbm_to_vmem [thread:$0]  %s1, 768, %s30, [#allocation6], 192, 192, 12
    $region9: #{tpu_custom_call.1} parent=1 // pred_fallthru
      _
    // Predicated region
    $region10: #{tpu_custom_call.1} parent=1 // pred_check
      _
    $region11: #{tpu_custom_call.1} parent=1 // pred_check_branch
      %37 = sbr.rel (0) target = $region13
    $region12: #{tpu_custom_call.1} parent=1 // pred_region
      %s39 = ssub.s32 96, 96
      %40 = vsyncadd [#allocation6], %s39
      %s42 = sshll.u32 [#allocation7], 4
      %s43 = int_to_ptr.vmem [resolvable:$true] %s42
      %45 = dma.hbm_to_vmem [thread:$0]  %s2, 96, %s43, [#allocation6]
    $region13: #{tpu_custom_call.1} parent=1 // pred_fallthru
      _
    // Predicated region
    $region14: #{tpu_custom_call.1} parent=1 // pred_check
      _
    $region15: #{tpu_custom_call.1} parent=1 // pred_check_branch
      %47 = sbr.rel (0) target = $region17
    $region16: #{tpu_custom_call.1} parent=1 // pred_region
      %s49 = ssub.s32 9216, 9216
      %50 = vsyncadd [#allocation9], %s49
      %s51 = sshll.u32 [#allocation8], 4
      %s52 = int_to_ptr.vmem [resolvable:$true] %s51
      %57 = dma.hbm_to_vmem [thread:$0]  %s3, 9216, %s52, [#allocation9], 192, 192, 12
    $region17: #{tpu_custom_call.1} parent=1 // pred_fallthru
      _
    // Predicated region
    $region18: #{tpu_custom_call.1} parent=1 // pred_check
      _
    $region19: #{tpu_custom_call.1} parent=1 // pred_check_branch
      %59 = sbr.rel (0) target = $region21
    $region20: #{tpu_custom_call.1} parent=1 // pred_region
      _
    $region21: #{tpu_custom_call.1} parent=1 // pred_fallthru
      _
    // Predicated region
    $region22: #{tpu_custom_call.1} parent=1 // pred_check
      _
    $region23: #{tpu_custom_call.1} parent=1 // pred_check_branch
      %61 = sbr.rel (0) target = $region25
    $region24: #{tpu_custom_call.1} parent=1 // pred_region
      %62 = dma.done [#allocation3], 128
    $region25: #{tpu_custom_call.1} parent=1 // pred_fallthru
      _
    // Predicated region
    $region26: #{tpu_custom_call.1} parent=1 // pred_check
      _
    $region27: #{tpu_custom_call.1} parent=1 // pred_check_branch
      %64 = sbr.rel (0) target = $region29
    $region28: #{tpu_custom_call.1} parent=1 // pred_region
      %65 = dma.done [#allocation6], 768
    $region29: #{tpu_custom_call.1} parent=1 // pred_fallthru
      _
    // Predicated region
    $region30: #{tpu_custom_call.1} parent=1 // pred_check
      _
    $region31: #{tpu_custom_call.1} parent=1 // pred_check_branch
      %67 = sbr.rel (0) target = $region33
    $region32: #{tpu_custom_call.1} parent=1 // pred_region
      %68 = dma.done [#allocation6], 96
    $region33: #{tpu_custom_call.1} parent=1 // pred_fallthru
      _
    // Predicated region
    $region34: #{tpu_custom_call.1} parent=1 // pred_check
      _
    $region35: #{tpu_custom_call.1} parent=1 // pred_check_branch
      %70 = sbr.rel (0) target = $region37
    $region36: #{tpu_custom_call.1} parent=1 // pred_region
      %71 = dma.done [#allocation9], 9216
    $region37: #{tpu_custom_call.1} parent=1 // pred_fallthru
      _
    %v73 = vld [vmem:[#allocation2] sm:$0xff]
    %v74 = vpack.c.bf16 %v73, %v73
    %v75 = vld [vmem:[#allocation5] sm:$0xff]
    %v76 = vld [vmem:[#allocation5 + $0x8] sm:$0xf]
    %v77 = vld [vmem:[#allocation5 + $0xc] sm:$0xff]
    %v78 = vld [vmem:[#allocation5 + $0x14] sm:$0xf]
    %v79 = vld [vmem:[#allocation5 + $0x18] sm:$0xff]
    %v80 = vld [vmem:[#allocation5 + $0x20] sm:$0xf]
    %v81 = vld [vmem:[#allocation5 + $0x24] sm:$0xff]
    %v82 = vld [vmem:[#allocation5 + $0x2c] sm:$0xf]
    %v91 = vunpack.c.l.b16 %v75
    %v92 = vunpack.c.h.b16 %v75
    %v93 = vunpack.c.l.b16 %v76
    %v94 = vunpack.c.l.b16 %v77
    %v95 = vunpack.c.h.b16 %v77
    %v96 = vunpack.c.l.b16 %v78
    %v97 = vunpack.c.l.b16 %v79
    %v98 = vunpack.c.h.b16 %v79
    %v99 = vunpack.c.l.b16 %v80
    %v100 = vunpack.c.l.b16 %v81
    %v101 = vunpack.c.h.b16 %v81
    %v102 = vunpack.c.l.b16 %v82
    %v103 = vpack.c.b16 %v94, %v91
    %v104 = vpack.c.b16 %v95, %v92
    %v105 = vpack.c.b16 %v96, %v93
    %v106 = vpack.c.b16 %v100, %v97
    %v107 = vpack.c.b16 %v101, %v98
    %v108 = vpack.c.b16 %v102, %v99
    %vm115 = vcmask 261120
    %v117 = vsel %vm115, %v74, 0
    %119 = vmatprep.subr.bf16.mxu0 0
    %120 = vmatpush1.bf16.msra.mxu0 0
    %121 = vmatprep.subr.bf16.mxu0 0
    %122 = vmatpush1.bf16.msra.mxu0 0
    %123 = vmatprep.subr.bf16.mxu0 0
    %124 = vmatpush1.bf16.msra.mxu0 0
    %125 = vmatprep.subr.bf16.mxu0 0
    %126 = vmatpush1.bf16.msra.mxu0 0
    %127 = vmatprep.subr.bf16.mxu0 0
    %128 = vmatpush1.bf16.msra.mxu0 0
    %129 = vmatprep.subr.bf16.mxu0 0
    %130 = vmatpush1.bf16.msra.mxu0 0
    %131 = vmatprep.subr.bf16.mxu0 %v107
    %132 = vmatpush1.bf16.msra.mxu0 %v106
    %133 = vmatprep.subr.bf16.mxu0 %v104
    %134 = vmatpush1.bf16.msra.mxu0 %v103
    %135 = vmatprep.subr.bf16.mxu0 0
    %136 = vmatpush2.bf16.msra.mxu0 0
    %137 = vmatprep.subr.bf16.mxu0 0
    %138 = vmatpush2.bf16.msra.mxu0 0
    %139 = vmatprep.subr.bf16.mxu0 0
    %140 = vmatpush2.bf16.msra.mxu0 0
    %141 = vmatprep.subr.bf16.mxu0 0
    %142 = vmatpush2.bf16.msra.mxu0 0
    %143 = vmatprep.subr.bf16.mxu0 0
    %144 = vmatpush2.bf16.msra.mxu0 0
    %145 = vmatprep.subr.bf16.mxu0 0
    %146 = vmatpush2.bf16.msra.mxu0 0
    %147 = vmatprep.subr.bf16.mxu0 0
    %148 = vmatpush2.bf16.msra.mxu0 0
    %149 = vmatprep.subr.bf16.mxu0 0
    %150 = vmatpush2.bf16.msra.mxu0 0
    %151 = vmatprep.mubr.bf16.mxu0 0
    %152 = vmatmul.mubr.bf16.gmra.mxu0 %v117
    %v153 = vpop.f32.mrf.mxu0
    %v154 = vadd.f32 0.0, %v153
    %v155 = vpop.f32.mrf.mxu0
    %v156 = vadd.f32 0.0, %v155
    %v157 = vpop.f32.mrf.mxu0
    %v158 = vpop.f32.mrf.mxu0
    %159 = vdwg.mxu0
    %160 = vmatprep.subr.bf16.mxu0 0
    %161 = vmatpush1.bf16.msra.mxu0 0
    %162 = vmatprep.subr.bf16.mxu0 0
    %163 = vmatpush1.bf16.msra.mxu0 0
    %164 = vmatprep.subr.bf16.mxu0 0
    %165 = vmatpush1.bf16.msra.mxu0 0
    %166 = vmatprep.subr.bf16.mxu0 0
    %167 = vmatpush1.bf16.msra.mxu0 0
    %168 = vmatprep.subr.bf16.mxu0 0
    %169 = vmatpush1.bf16.msra.mxu0 0
    %170 = vmatprep.subr.bf16.mxu0 0
    %171 = vmatpush1.bf16.msra.mxu0 0
    %172 = vmatprep.subr.bf16.mxu0 0
    %173 = vmatpush1.bf16.msra.mxu0 %v108
    %174 = vmatprep.subr.bf16.mxu0 0
    %175 = vmatpush1.bf16.msra.mxu0 %v105
    %176 = vmatprep.subr.bf16.mxu0 0
    %177 = vmatpush2.bf16.msra.mxu0 0
    %178 = vmatprep.subr.bf16.mxu0 0
    %179 = vmatpush2.bf16.msra.mxu0 0
    %180 = vmatprep.subr.bf16.mxu0 0
    %181 = vmatpush2.bf16.msra.mxu0 0
    %182 = vmatprep.subr.bf16.mxu0 0
    %183 = vmatpush2.bf16.msra.mxu0 0
    %184 = vmatprep.subr.bf16.mxu0 0
    %185 = vmatpush2.bf16.msra.mxu0 0
    %186 = vmatprep.subr.bf16.mxu0 0
    %187 = vmatpush2.bf16.msra.mxu0 0
    %188 = vmatprep.subr.bf16.mxu0 0
    %189 = vmatpush2.bf16.msra.mxu0 0
    %190 = vmatprep.subr.bf16.mxu0 0
    %191 = vmatpush2.bf16.msra.mxu0 0
    %192 = vmatprep.mubr.bf16.mxu0 0
    %193 = vmatmul.mubr.bf16.gmra.mxu0 %v117
    %v194 = vpop.f32.mrf.mxu0
    %v195 = vadd.f32 0.0, %v194
    %v196 = vpop.f32.mrf.mxu0
    %v197 = vpop.f32.mrf.mxu0
    %v198 = vpop.f32.mrf.mxu0
    %199 = vdwg.mxu0
    %v200 = vrot.slane %v154, 4
    %v201 = vadd.f32 %v154, %v200
    %v202 = vrot.slane %v201, 2
    %v203 = vadd.f32 %v201, %v202
    %v204 = vrot.slane %v203, 1
    %v205 = vadd.f32 %v203, %v204
    %v206 = vrot.slane %v156, 4
    %v207 = vadd.f32 %v156, %v206
    %v208 = vrot.slane %v207, 2
    %v209 = vadd.f32 %v207, %v208
    %v210 = vrot.slane %v209, 1
    %v211 = vadd.f32 %v209, %v210
    %v212 = vrot.slane %v195, 4
    %v213 = vadd.f32 %v195, %v212
    %v214 = vrot.slane %v213, 2
    %v215 = vadd.f32 %v213, %v214
    %v216 = vrot.slane %v215, 1
    %v217 = vadd.f32 %v215, %v216
    %v218 = vmul.f32 %v205, 0.125
    %v219 = vmul.f32 %v211, 0.125
    %v220 = vmul.f32 %v217, 0.125
    %v221 = vmul.f32 %v154, %v154
    %v222 = vmul.f32 %v156, %v156
    %v223 = vmul.f32 %v195, %v195
    %v224 = vrot.slane %v221, 4
    %v225 = vadd.f32 %v221, %v224
    %v226 = vrot.slane %v225, 2
    %v227 = vadd.f32 %v225, %v226
    %v228 = vrot.slane %v227, 1
    %v229 = vadd.f32 %v227, %v228
    %v230 = vrot.slane %v222, 4
    %v231 = vadd.f32 %v222, %v230
    %v232 = vrot.slane %v231, 2
    %v233 = vadd.f32 %v231, %v232
    %v234 = vrot.slane %v233, 1
    %v235 = vadd.f32 %v233, %v234
    %v236 = vrot.slane %v223, 4
    %v237 = vadd.f32 %v223, %v236
    %v238 = vrot.slane %v237, 2
    %v239 = vadd.f32 %v237, %v238
    %v240 = vrot.slane %v239, 1
    %v241 = vadd.f32 %v239, %v240
    %v242 = vmul.f32 %v229, 0.125
    %v243 = vmul.f32 %v235, 0.125
    %v244 = vmul.f32 %v241, 0.125
    %v245 = vmul.f32 %v218, %v218
    %v246 = vmul.f32 %v219, %v219
    %v247 = vmul.f32 %v220, %v220
    %v248 = vsub.f32 %v242, %v245
    %v249 = vsub.f32 %v243, %v246
    %v250 = vsub.f32 %v244, %v247
    %v251 = vmax.f32 %v248, 0.0
    %v252 = vmax.f32 %v249, 0.0
    %v253 = vmax.f32 %v250, 0.0
    %v254 = vld [vmem:[#allocation7] sm:$0x3f]
    %v255 = vadd.f32 %v251, 1e-05
    %v256 = vadd.f32 %v252, 1e-05
    %v257 = vadd.f32 %v253, 1e-05
    %v258 = vrsqrt.pop %v255
    %v259 = vrsqrt.pop %v256
    %v260 = vrsqrt.pop %v257
    %v264 = vcombine.low %v258, %v259
    %v266 = vunpack.c.l.s4 1983009808
    %v267 = vunpack.c.0.s8 %v266
    %v268 = vlaneseq
    %v269 = vshrl.u32 %v268, 7
    %v270 = vsub.s32 %v267, %v269
    %v271 = vrot.slane %v264, %v270
    %v273 = vunpack.c.l.s4 1983009808
    %v274 = vunpack.c.0.s8 %v273
    %v275 = vlaneseq
    %v276 = vshrl.u32 %v275, 7
    %v277 = vsub.s32 %v274, %v276
    %v278 = vrot.slane %v260, %v277
    %v279 = vcombine.low %v271, %v278
    %v281 = vmul.f32 %v254, %v279
    %v283 = vlaneseq
    %v284 = vshrl.u32 %v283, 7
    %v285 = vsub.s32 0, %v284
    %v286 = vrot.slane %v281, %v285
    %v287 = vlaneseq
    %v288 = vshrl.u32 %v287, 7
    %v289 = vsub.s32 2, %v288
    %v290 = vrot.slane %v281, %v289
    %v291 = vlaneseq
    %v292 = vshrl.u32 %v291, 7
    %v293 = vsub.s32 4, %v292
    %v294 = vrot.slane %v281, %v293
    %v298 = vmul.f32 %v218, %v286
    %v299 = vmul.f32 %v219, %v290
    %v300 = vmul.f32 %v220, %v294
    %v304 = vcombine.low %v298, %v299
    %v306 = vunpack.c.l.s4 1983009808
    %v307 = vunpack.c.0.s8 %v306
    %v308 = vlaneseq
    %v309 = vshrl.u32 %v308, 7
    %v310 = vsub.s32 %v307, %v309
    %v311 = vrot.slane %v304, %v310
    %v313 = vunpack.c.l.s4 1983009808
    %v314 = vunpack.c.0.s8 %v313
    %v315 = vlaneseq
    %v316 = vshrl.u32 %v315, 7
    %v317 = vsub.s32 %v314, %v316
    %v318 = vrot.slane %v300, %v317
    %v319 = vcombine.low %v311, %v318
    %v320 = vrot.slane %v319, 7
    %v322 = vsub.f32 %v254, %v320
    %v323 = vlaneseq
    %v324 = vshrl.u32 %v323, 7
    %v325 = vsub.s32 0, %v324
    %v326 = vrot.slane %v286, %v325
    %v327 = vlaneseq
    %v328 = vshrl.u32 %v327, 7
    %v329 = vsub.s32 0, %v328
    %v330 = vrot.slane %v290, %v329
    %v331 = vlaneseq
    %v332 = vshrl.u32 %v331, 7
    %v333 = vsub.s32 0, %v332
    %v334 = vrot.slane %v294, %v333
    %v335 = vmul.f32 %v154, %v326
    %v336 = vmul.f32 %v156, %v330
    %v337 = vmul.f32 %v195, %v334
    %v339 = vlaneseq
    %v340 = vshrl.u32 %v339, 7
    %v341 = vsub.s32 1, %v340
    %v342 = vrot.slane %v322, %v341
    %v343 = vlaneseq
    %v344 = vshrl.u32 %v343, 7
    %v345 = vsub.s32 3, %v344
    %v346 = vrot.slane %v322, %v345
    %v347 = vlaneseq
    %v348 = vshrl.u32 %v347, 7
    %v349 = vsub.s32 5, %v348
    %v350 = vrot.slane %v322, %v349
    %v354 = vlaneseq
    %v355 = vshrl.u32 %v354, 7
    %v356 = vsub.s32 1, %v355
    %v357 = vrot.slane %v342, %v356
    %v358 = vlaneseq
    %v359 = vshrl.u32 %v358, 7
    %v360 = vsub.s32 1, %v359
    %v361 = vrot.slane %v346, %v360
    %v362 = vlaneseq
    %v363 = vshrl.u32 %v362, 7
    %v364 = vsub.s32 1, %v363
    %v365 = vrot.slane %v350, %v364
    %v366 = vadd.f32 %v335, %v357
    %v367 = vadd.f32 %v336, %v361
    %v368 = vadd.f32 %v337, %v365
    %v369 = vmax.f32 %v366, 0.0
    %v370 = vmax.f32 %v367, 0.0
    %v371 = vmax.f32 %v368, 0.0
    %v372 = vpack.c.bf16 %v369, %v369
    %v373 = vpack.c.bf16 %v370, %v370
    %v374 = vpack.c.bf16 %v371, %v371
    %v375 = vld [vmem:[#allocation8] sm:$0xff]
    %v376 = vld [vmem:[#allocation8 + $0x8] sm:$0xf]
    %v377 = vld [vmem:[#allocation8 + $0xc] sm:$0xff]
    %v378 = vld [vmem:[#allocation8 + $0x14] sm:$0xf]
    %v379 = vld [vmem:[#allocation8 + $0x18] sm:$0xff]
    %v380 = vld [vmem:[#allocation8 + $0x20] sm:$0xf]
    %v381 = vld [vmem:[#allocation8 + $0x24] sm:$0xff]
    %v382 = vld [vmem:[#allocation8 + $0x2c] sm:$0xf]
    %v383 = vld [vmem:[#allocation8 + $0x30] sm:$0xff]
    %v384 = vld [vmem:[#allocation8 + $0x38] sm:$0xf]
    %v385 = vld [vmem:[#allocation8 + $0x3c] sm:$0xff]
    %v386 = vld [vmem:[#allocation8 + $0x44] sm:$0xf]
    %v387 = vld [vmem:[#allocation8 + $0x48] sm:$0xff]
    %v388 = vld [vmem:[#allocation8 + $0x50] sm:$0xf]
    %v389 = vld [vmem:[#allocation8 + $0x54] sm:$0xff]
    %v390 = vld [vmem:[#allocation8 + $0x5c] sm:$0xf]
    %v391 = vld [vmem:[#allocation8 + $0x60] sm:$0xff]
    %v392 = vld [vmem:[#allocation8 + $0x68] sm:$0xf]
    %v393 = vld [vmem:[#allocation8 + $0x6c] sm:$0xff]
    %v394 = vld [vmem:[#allocation8 + $0x74] sm:$0xf]
    %v395 = vld [vmem:[#allocation8 + $0x78] sm:$0xff]
    %v396 = vld [vmem:[#allocation8 + $0x80] sm:$0xf]
    %v397 = vld [vmem:[#allocation8 + $0x84] sm:$0xff]
    %v398 = vld [vmem:[#allocation8 + $0x8c] sm:$0xf]
    %v399 = vld [vmem:[#allocation8 + $0x90] sm:$0xff]
    %v400 = vld [vmem:[#allocation8 + $0x98] sm:$0xf]
    %v401 = vld [vmem:[#allocation8 + $0x9c] sm:$0xff]
    %v402 = vld [vmem:[#allocation8 + $0xa4] sm:$0xf]
    %v403 = vld [vmem:[#allocation8 + $0xa8] sm:$0xff]
    %v404 = vld [vmem:[#allocation8 + $0xb0] sm:$0xf]
    %v405 = vld [vmem:[#allocation8 + $0xb4] sm:$0xff]
    %v406 = vld [vmem:[#allocation8 + $0xbc] sm:$0xf]
    %v407 = vld [vmem:[#allocation8 + $0xc0] sm:$0xff]
    %v408 = vld [vmem:[#allocation8 + $0xc8] sm:$0xf]
    %v409 = vld [vmem:[#allocation8 + $0xcc] sm:$0xff]
    %v410 = vld [vmem:[#allocation8 + $0xd4] sm:$0xf]
    %v411 = vld [vmem:[#allocation8 + $0xd8] sm:$0xff]
    %v412 = vld [vmem:[#allocation8 + $0xe0] sm:$0xf]
    %v413 = vld [vmem:[#allocation8 + $0xe4] sm:$0xff]
    %v414 = vld [vmem:[#allocation8 + $0xec] sm:$0xf]
    %v415 = vld [vmem:[#allocation8 + $0xf0] sm:$0xff]
    %v416 = vld [vmem:[#allocation8 + $0xf8] sm:$0xf]
    %v417 = vld [vmem:[#allocation8 + $0xfc] sm:$0xff]
    %v418 = vld [vmem:[#allocation8 + $0x104] sm:$0xf]
    %v419 = vld [vmem:[#allocation8 + $0x108] sm:$0xff]
    %v420 = vld [vmem:[#allocation8 + $0x110] sm:$0xf]
    %v421 = vld [vmem:[#allocation8 + $0x114] sm:$0xff]
    %v422 = vld [vmem:[#allocation8 + $0x11c] sm:$0xf]
    %v423 = vld [vmem:[#allocation8 + $0x120] sm:$0xff]
    %v424 = vld [vmem:[#allocation8 + $0x128] sm:$0xf]
    %v425 = vld [vmem:[#allocation8 + $0x12c] sm:$0xff]
    %v426 = vld [vmem:[#allocation8 + $0x134] sm:$0xf]
    %v427 = vld [vmem:[#allocation8 + $0x138] sm:$0xff]
    %v428 = vld [vmem:[#allocation8 + $0x140] sm:$0xf]
    %v429 = vld [vmem:[#allocation8 + $0x144] sm:$0xff]
    %v430 = vld [vmem:[#allocation8 + $0x14c] sm:$0xf]
    %v431 = vld [vmem:[#allocation8 + $0x150] sm:$0xff]
    %v432 = vld [vmem:[#allocation8 + $0x158] sm:$0xf]
    %v433 = vld [vmem:[#allocation8 + $0x15c] sm:$0xff]
    %v434 = vld [vmem:[#allocation8 + $0x164] sm:$0xf]
    %v435 = vld [vmem:[#allocation8 + $0x168] sm:$0xff]
    %v436 = vld [vmem:[#allocation8 + $0x170] sm:$0xf]
    %v437 = vld [vmem:[#allocation8 + $0x174] sm:$0xff]
    %v438 = vld [vmem:[#allocation8 + $0x17c] sm:$0xf]
    %v439 = vld [vmem:[#allocation8 + $0x180] sm:$0xff]
    %v440 = vld [vmem:[#allocation8 + $0x188] sm:$0xf]
    %v441 = vld [vmem:[#allocation8 + $0x18c] sm:$0xff]
    %v442 = vld [vmem:[#allocation8 + $0x194] sm:$0xf]
    %v443 = vld [vmem:[#allocation8 + $0x198] sm:$0xff]
    %v444 = vld [vmem:[#allocation8 + $0x1a0] sm:$0xf]
    %v445 = vld [vmem:[#allocation8 + $0x1a4] sm:$0xff]
    %v446 = vld [vmem:[#allocation8 + $0x1ac] sm:$0xf]
    %v447 = vld [vmem:[#allocation8 + $0x1b0] sm:$0xff]
    %v448 = vld [vmem:[#allocation8 + $0x1b8] sm:$0xf]
    %v449 = vld [vmem:[#allocation8 + $0x1bc] sm:$0xff]
    %v450 = vld [vmem:[#allocation8 + $0x1c4] sm:$0xf]
    %v451 = vld [vmem:[#allocation8 + $0x1c8] sm:$0xff]
    %v452 = vld [vmem:[#allocation8 + $0x1d0] sm:$0xf]
    %v453 = vld [vmem:[#allocation8 + $0x1d4] sm:$0xff]
    %v454 = vld [vmem:[#allocation8 + $0x1dc] sm:$0xf]
    %v455 = vld [vmem:[#allocation8 + $0x1e0] sm:$0xff]
    %v456 = vld [vmem:[#allocation8 + $0x1e8] sm:$0xf]
    %v457 = vld [vmem:[#allocation8 + $0x1ec] sm:$0xff]
    %v458 = vld [vmem:[#allocation8 + $0x1f4] sm:$0xf]
    %v459 = vld [vmem:[#allocation8 + $0x1f8] sm:$0xff]
    %v460 = vld [vmem:[#allocation8 + $0x200] sm:$0xf]
    %v461 = vld [vmem:[#allocation8 + $0x204] sm:$0xff]
    %v462 = vld [vmem:[#allocation8 + $0x20c] sm:$0xf]
    %v463 = vld [vmem:[#allocation8 + $0x210] sm:$0xff]
    %v464 = vld [vmem:[#allocation8 + $0x218] sm:$0xf]
    %v465 = vld [vmem:[#allocation8 + $0x21c] sm:$0xff]
    %v466 = vld [vmem:[#allocation8 + $0x224] sm:$0xf]
    %v467 = vld [vmem:[#allocation8 + $0x228] sm:$0xff]
    %v468 = vld [vmem:[#allocation8 + $0x230] sm:$0xf]
    %v469 = vld [vmem:[#allocation8 + $0x234] sm:$0xff]
    %v470 = vld [vmem:[#allocation8 + $0x23c] sm:$0xf]
    %v471 = vld [vmem:[%s4] sm:$0x7]
    %v473 = vlaneseq
    %v474 = vshrl.u32 %v473, 7
    %v475 = vsub.s32 0, %v474
    %v476 = vrot.slane %v471, %v475
    %v477 = vlaneseq
    %v478 = vshrl.u32 %v477, 7
    %v479 = vsub.s32 1, %v478
    %v480 = vrot.slane %v471, %v479
    %v481 = vlaneseq
    %v482 = vshrl.u32 %v481, 7
    %v483 = vsub.s32 2, %v482
    %v484 = vrot.slane %v471, %v483
    %v584 = vunpack.c.l.b16 %v375
    %v585 = vunpack.c.h.b16 %v375
    %v586 = vunpack.c.l.b16 %v376
    %v587 = vunpack.c.l.b16 %v377
    %v588 = vunpack.c.h.b16 %v377
    %v589 = vunpack.c.l.b16 %v378
    %v590 = vunpack.c.l.b16 %v379
    %v591 = vunpack.c.h.b16 %v379
    %v592 = vunpack.c.l.b16 %v380
    %v593 = vunpack.c.l.b16 %v381
    %v594 = vunpack.c.h.b16 %v381
    %v595 = vunpack.c.l.b16 %v382
    %v596 = vunpack.c.l.b16 %v383
    %v597 = vunpack.c.h.b16 %v383
    %v598 = vunpack.c.l.b16 %v384
    %v599 = vunpack.c.l.b16 %v385
    %v600 = vunpack.c.h.b16 %v385
    %v601 = vunpack.c.l.b16 %v386
    %v602 = vunpack.c.l.b16 %v387
    %v603 = vunpack.c.h.b16 %v387
    %v604 = vunpack.c.l.b16 %v388
    %v605 = vunpack.c.l.b16 %v389
    %v606 = vunpack.c.h.b16 %v389
    %v607 = vunpack.c.l.b16 %v390
    %v608 = vunpack.c.l.b16 %v391
    %v609 = vunpack.c.h.b16 %v391
    %v610 = vunpack.c.l.b16 %v392
    %v611 = vunpack.c.l.b16 %v393
    %v612 = vunpack.c.h.b16 %v393
    %v613 = vunpack.c.l.b16 %v394
    %v614 = vunpack.c.l.b16 %v395
    %v615 = vunpack.c.h.b16 %v395
    %v616 = vunpack.c.l.b16 %v396
    %v617 = vunpack.c.l.b16 %v397
    %v618 = vunpack.c.h.b16 %v397
    %v619 = vunpack.c.l.b16 %v398
    %v620 = vunpack.c.l.b16 %v399
    %v621 = vunpack.c.h.b16 %v399
    %v622 = vunpack.c.l.b16 %v400
    %v623 = vunpack.c.l.b16 %v401
    %v624 = vunpack.c.h.b16 %v401
    %v625 = vunpack.c.l.b16 %v402
    %v626 = vunpack.c.l.b16 %v403
    %v627 = vunpack.c.h.b16 %v403
    %v628 = vunpack.c.l.b16 %v404
    %v629 = vunpack.c.l.b16 %v405
    %v630 = vunpack.c.h.b16 %v405
    %v631 = vunpack.c.l.b16 %v406
    %v632 = vunpack.c.l.b16 %v407
    %v633 = vunpack.c.h.b16 %v407
    %v634 = vunpack.c.l.b16 %v408
    %v635 = vunpack.c.l.b16 %v409
    %v636 = vunpack.c.h.b16 %v409
    %v637 = vunpack.c.l.b16 %v410
    %v638 = vunpack.c.l.b16 %v411
    %v639 = vunpack.c.h.b16 %v411
    %v640 = vunpack.c.l.b16 %v412
    %v641 = vunpack.c.l.b16 %v413
    %v642 = vunpack.c.h.b16 %v413
    %v643 = vunpack.c.l.b16 %v414
    %v644 = vunpack.c.l.b16 %v415
    %v645 = vunpack.c.h.b16 %v415
    %v646 = vunpack.c.l.b16 %v416
    %v647 = vunpack.c.l.b16 %v417
    %v648 = vunpack.c.h.b16 %v417
    %v649 = vunpack.c.l.b16 %v418
    %v650 = vunpack.c.l.b16 %v419
    %v651 = vunpack.c.h.b16 %v419
    %v652 = vunpack.c.l.b16 %v420
    %v653 = vunpack.c.l.b16 %v421
    %v654 = vunpack.c.h.b16 %v421
    %v655 = vunpack.c.l.b16 %v422
    %v656 = vunpack.c.l.b16 %v423
    %v657 = vunpack.c.h.b16 %v423
    %v658 = vunpack.c.l.b16 %v424
    %v659 = vunpack.c.l.b16 %v425
    %v660 = vunpack.c.h.b16 %v425
    %v661 = vunpack.c.l.b16 %v426
    %v662 = vunpack.c.l.b16 %v427
    %v663 = vunpack.c.h.b16 %v427
    %v664 = vunpack.c.l.b16 %v428
    %v665 = vunpack.c.l.b16 %v429
    %v666 = vunpack.c.h.b16 %v429
    %v667 = vunpack.c.l.b16 %v430
    %v668 = vunpack.c.l.b16 %v431
    %v669 = vunpack.c.h.b16 %v431
    %v670 = vunpack.c.l.b16 %v432
    %v671 = vunpack.c.l.b16 %v433
    %v672 = vunpack.c.h.b16 %v433
    %v673 = vunpack.c.l.b16 %v434
    %v674 = vunpack.c.l.b16 %v435
    %v675 = vunpack.c.h.b16 %v435
    %v676 = vunpack.c.l.b16 %v436
    %v677 = vunpack.c.l.b16 %v437
    %v678 = vunpack.c.h.b16 %v437
    %v679 = vunpack.c.l.b16 %v438
    %v680 = vunpack.c.l.b16 %v439
    %v681 = vunpack.c.h.b16 %v439
    %v682 = vunpack.c.l.b16 %v440
    %v683 = vunpack.c.l.b16 %v441
    %v684 = vunpack.c.h.b16 %v441
    %v685 = vunpack.c.l.b16 %v442
    %v686 = vunpack.c.l.b16 %v443
    %v687 = vunpack.c.h.b16 %v443
    %v688 = vunpack.c.l.b16 %v444
    %v689 = vunpack.c.l.b16 %v445
    %v690 = vunpack.c.h.b16 %v445
    %v691 = vunpack.c.l.b16 %v446
    %v692 = vunpack.c.l.b16 %v447
    %v693 = vunpack.c.h.b16 %v447
    %v694 = vunpack.c.l.b16 %v448
    %v695 = vunpack.c.l.b16 %v449
    %v696 = vunpack.c.h.b16 %v449
    %v697 = vunpack.c.l.b16 %v450
    %v698 = vunpack.c.l.b16 %v451
    %v699 = vunpack.c.h.b16 %v451
    %v700 = vunpack.c.l.b16 %v452
    %v701 = vunpack.c.l.b16 %v453
    %v702 = vunpack.c.h.b16 %v453
    %v703 = vunpack.c.l.b16 %v454
    %v704 = vunpack.c.l.b16 %v455
    %v705 = vunpack.c.h.b16 %v455
    %v706 = vunpack.c.l.b16 %v456
    %v707 = vunpack.c.l.b16 %v457
    %v708 = vunpack.c.h.b16 %v457
    %v709 = vunpack.c.l.b16 %v458
    %v710 = vunpack.c.l.b16 %v459
    %v711 = vunpack.c.h.b16 %v459
    %v712 = vunpack.c.l.b16 %v460
    %v713 = vunpack.c.l.b16 %v461
    %v714 = vunpack.c.h.b16 %v461
    %v715 = vunpack.c.l.b16 %v462
    %v716 = vunpack.c.l.b16 %v463
    %v717 = vunpack.c.h.b16 %v463
    %v718 = vunpack.c.l.b16 %v464
    %v719 = vunpack.c.l.b16 %v465
    %v720 = vunpack.c.h.b16 %v465
    %v721 = vunpack.c.l.b16 %v466
    %v722 = vunpack.c.l.b16 %v467
    %v723 = vunpack.c.h.b16 %v467
    %v724 = vunpack.c.l.b16 %v468
    %v725 = vunpack.c.l.b16 %v469
    %v726 = vunpack.c.h.b16 %v469
    %v727 = vunpack.c.l.b16 %v470
    %v728 = vpack.c.b16 %v587, %v584
    %v729 = vpack.c.b16 %v588, %v585
    %v730 = vpack.c.b16 %v589, %v586
    %v731 = vpack.c.b16 %v593, %v590
    %v732 = vpack.c.b16 %v594, %v591
    %v733 = vpack.c.b16 %v595, %v592
    %v734 = vpack.c.b16 %v599, %v596
    %v735 = vpack.c.b16 %v600, %v597
    %v736 = vpack.c.b16 %v601, %v598
    %v737 = vpack.c.b16 %v605, %v602
    %v738 = vpack.c.b16 %v606, %v603
    %v739 = vpack.c.b16 %v607, %v604
    %v740 = vpack.c.b16 %v611, %v608
    %v741 = vpack.c.b16 %v612, %v609
    %v742 = vpack.c.b16 %v613, %v610
    %v743 = vpack.c.b16 %v617, %v614
    %v744 = vpack.c.b16 %v618, %v615
    %v745 = vpack.c.b16 %v619, %v616
    %v746 = vpack.c.b16 %v623, %v620
    %v747 = vpack.c.b16 %v624, %v621
    %v748 = vpack.c.b16 %v625, %v622
    %v749 = vpack.c.b16 %v629, %v626
    %v750 = vpack.c.b16 %v630, %v627
    %v751 = vpack.c.b16 %v631, %v628
    %v752 = vpack.c.b16 %v635, %v632
    %v753 = vpack.c.b16 %v636, %v633
    %v754 = vpack.c.b16 %v637, %v634
    %v755 = vpack.c.b16 %v641, %v638
    %v756 = vpack.c.b16 %v642, %v639
    %v757 = vpack.c.b16 %v643, %v640
    %v758 = vpack.c.b16 %v647, %v644
    %v759 = vpack.c.b16 %v648, %v645
    %v760 = vpack.c.b16 %v649, %v646
    %v761 = vpack.c.b16 %v653, %v650
    %v762 = vpack.c.b16 %v654, %v651
    %v763 = vpack.c.b16 %v655, %v652
    %v764 = vpack.c.b16 %v659, %v656
    %v765 = vpack.c.b16 %v660, %v657
    %v766 = vpack.c.b16 %v661, %v658
    %v767 = vpack.c.b16 %v665, %v662
    %v768 = vpack.c.b16 %v666, %v663
    %v769 = vpack.c.b16 %v667, %v664
    %v770 = vpack.c.b16 %v671, %v668
    %v771 = vpack.c.b16 %v672, %v669
    %v772 = vpack.c.b16 %v673, %v670
    %v773 = vpack.c.b16 %v677, %v674
    %v774 = vpack.c.b16 %v678, %v675
    %v775 = vpack.c.b16 %v679, %v676
    %v776 = vpack.c.b16 %v683, %v680
    %v777 = vpack.c.b16 %v684, %v681
    %v778 = vpack.c.b16 %v685, %v682
    %v779 = vpack.c.b16 %v689, %v686
    %v780 = vpack.c.b16 %v690, %v687
    %v781 = vpack.c.b16 %v691, %v688
    %v782 = vpack.c.b16 %v695, %v692
    %v783 = vpack.c.b16 %v696, %v693
    %v784 = vpack.c.b16 %v697, %v694
    %v785 = vpack.c.b16 %v701, %v698
    %v786 = vpack.c.b16 %v702, %v699
    %v787 = vpack.c.b16 %v703, %v700
    %v788 = vpack.c.b16 %v707, %v704
    %v789 = vpack.c.b16 %v708, %v705
    %v790 = vpack.c.b16 %v709, %v706
    %v791 = vpack.c.b16 %v713, %v710
    %v792 = vpack.c.b16 %v714, %v711
    %v793 = vpack.c.b16 %v715, %v712
    %v794 = vpack.c.b16 %v719, %v716
    %v795 = vpack.c.b16 %v720, %v717
    %v796 = vpack.c.b16 %v721, %v718
    %v797 = vpack.c.b16 %v725, %v722
    %v798 = vpack.c.b16 %v726, %v723
    %v799 = vpack.c.b16 %v727, %v724
    %872 = vmatprep.subr.bf16.mxu0 %v750
    %873 = vmatpush1.bf16.msra.mxu0 %v749
    %874 = vmatprep.subr.bf16.mxu0 %v747
    %875 = vmatpush1.bf16.msra.mxu0 %v746
    %876 = vmatprep.subr.bf16.mxu0 %v744
    %877 = vmatpush1.bf16.msra.mxu0 %v743
    %878 = vmatprep.subr.bf16.mxu0 %v741
    %879 = vmatpush1.bf16.msra.mxu0 %v740
    %880 = vmatprep.subr.bf16.mxu0 %v738
    %881 = vmatpush1.bf16.msra.mxu0 %v737
    %882 = vmatprep.subr.bf16.mxu0 %v735
    %883 = vmatpush1.bf16.msra.mxu0 %v734
    %884 = vmatprep.subr.bf16.mxu0 %v732
    %885 = vmatpush1.bf16.msra.mxu0 %v731
    %886 = vmatprep.subr.bf16.mxu0 %v729
    %887 = vmatpush1.bf16.msra.mxu0 %v728
    %888 = vmatprep.subr.bf16.mxu0 %v774
    %889 = vmatpush2.bf16.msra.mxu0 %v773
    %890 = vmatprep.subr.bf16.mxu0 %v771
    %891 = vmatpush2.bf16.msra.mxu0 %v770
    %892 = vmatprep.subr.bf16.mxu0 %v768
    %893 = vmatpush2.bf16.msra.mxu0 %v767
    %894 = vmatprep.subr.bf16.mxu0 %v765
    %895 = vmatpush2.bf16.msra.mxu0 %v764
    %896 = vmatprep.subr.bf16.mxu0 %v762
    %897 = vmatpush2.bf16.msra.mxu0 %v761
    %898 = vmatprep.subr.bf16.mxu0 %v759
    %899 = vmatpush2.bf16.msra.mxu0 %v758
    %900 = vmatprep.subr.bf16.mxu0 %v756
    %901 = vmatpush2.bf16.msra.mxu0 %v755
    %902 = vmatprep.subr.bf16.mxu0 %v753
    %903 = vmatpush2.bf16.msra.mxu0 %v752
    %904 = vmatprep.mubr.bf16.mxu0 %v373
    %905 = vmatmul.mubr.bf16.gmra.mxu0 %v372
    %v906 = vpop.f32.mrf.mxu0
    %v907 = vadd.f32 %v476, %v906
    %v908 = vpop.f32.mrf.mxu0
    %v909 = vadd.f32 %v480, %v908
    %v910 = vpop.f32.mrf.mxu0
    %v911 = vpop.f32.mrf.mxu0
    %912 = vdwg.mxu0
    %913 = vmatprep.subr.bf16.mxu0 %v798
    %914 = vmatpush1.bf16.msra.mxu0 %v797
    %915 = vmatprep.subr.bf16.mxu0 %v795
    %916 = vmatpush1.bf16.msra.mxu0 %v794
    %917 = vmatprep.subr.bf16.mxu0 %v792
    %918 = vmatpush1.bf16.msra.mxu0 %v791
    %919 = vmatprep.subr.bf16.mxu0 %v789
    %920 = vmatpush1.bf16.msra.mxu0 %v788
    %921 = vmatprep.subr.bf16.mxu0 %v786
    %922 = vmatpush1.bf16.msra.mxu0 %v785
    %923 = vmatprep.subr.bf16.mxu0 %v783
    %924 = vmatpush1.bf16.msra.mxu0 %v782
    %925 = vmatprep.subr.bf16.mxu0 %v780
    %926 = vmatpush1.bf16.msra.mxu0 %v779
    %927 = vmatprep.subr.bf16.mxu0 %v777
    %928 = vmatpush1.bf16.msra.mxu0 %v776
    %929 = vmatprep.subr.bf16.mxu0 0
    %930 = vmatpush2.bf16.msra.mxu0 0
    %931 = vmatprep.subr.bf16.mxu0 0
    %932 = vmatpush2.bf16.msra.mxu0 0
    %933 = vmatprep.subr.bf16.mxu0 0
    %934 = vmatpush2.bf16.msra.mxu0 0
    %935 = vmatprep.subr.bf16.mxu0 0
    %936 = vmatpush2.bf16.msra.mxu0 0
    %937 = vmatprep.subr.bf16.mxu0 0
    %938 = vmatpush2.bf16.msra.mxu0 0
    %939 = vmatprep.subr.bf16.mxu0 0
    %940 = vmatpush2.bf16.msra.mxu0 0
    %941 = vmatprep.subr.bf16.mxu0 0
    %942 = vmatpush2.bf16.msra.mxu0 0
    %943 = vmatprep.subr.bf16.mxu0 0
    %944 = vmatpush2.bf16.msra.mxu0 0
    %945 = vmatprep.mubr.bf16.mxu0 0
    %946 = vmatmul.mubr.bf16.gmra.mxu0 %v374
    %v947 = vpop.f32.mrf.mxu0
    %v948 = vadd.f32 %v907, %v947
    %v949 = vpop.f32.mrf.mxu0
    %v950 = vadd.f32 %v909, %v949
    %v951 = vpop.f32.mrf.mxu0
    %v952 = vpop.f32.mrf.mxu0
    %953 = vdwg.mxu0
    %954 = vmatprep.subr.bf16.mxu0 0
    %955 = vmatpush1.bf16.msra.mxu0 %v751
    %956 = vmatprep.subr.bf16.mxu0 0
    %957 = vmatpush1.bf16.msra.mxu0 %v748
    %958 = vmatprep.subr.bf16.mxu0 0
    %959 = vmatpush1.bf16.msra.mxu0 %v745
    %960 = vmatprep.subr.bf16.mxu0 0
    %961 = vmatpush1.bf16.msra.mxu0 %v742
    %962 = vmatprep.subr.bf16.mxu0 0
    %963 = vmatpush1.bf16.msra.mxu0 %v739
    %964 = vmatprep.subr.bf16.mxu0 0
    %965 = vmatpush1.bf16.msra.mxu0 %v736
    %966 = vmatprep.subr.bf16.mxu0 0
    %967 = vmatpush1.bf16.msra.mxu0 %v733
    %968 = vmatprep.subr.bf16.mxu0 0
    %969 = vmatpush1.bf16.msra.mxu0 %v730
    %970 = vmatprep.subr.bf16.mxu0 0
    %971 = vmatpush2.bf16.msra.mxu0 %v775
    %972 = vmatprep.subr.bf16.mxu0 0
    %973 = vmatpush2.bf16.msra.mxu0 %v772
    %974 = vmatprep.subr.bf16.mxu0 0
    %975 = vmatpush2.bf16.msra.mxu0 %v769
    %976 = vmatprep.subr.bf16.mxu0 0
    %977 = vmatpush2.bf16.msra.mxu0 %v766
    %978 = vmatprep.subr.bf16.mxu0 0
    %979 = vmatpush2.bf16.msra.mxu0 %v763
    %980 = vmatprep.subr.bf16.mxu0 0
    %981 = vmatpush2.bf16.msra.mxu0 %v760
    %982 = vmatprep.subr.bf16.mxu0 0
    %983 = vmatpush2.bf16.msra.mxu0 %v757
    %984 = vmatprep.subr.bf16.mxu0 0
    %985 = vmatpush2.bf16.msra.mxu0 %v754
    %986 = vmatprep.mubr.bf16.mxu0 %v373
    %987 = vmatmul.mubr.bf16.gmra.mxu0 %v372
    %v988 = vpop.f32.mrf.mxu0
    %v989 = vadd.f32 %v484, %v988
    %v990 = vpop.f32.mrf.mxu0
    %v991 = vpop.f32.mrf.mxu0
    %v992 = vpop.f32.mrf.mxu0
    %993 = vdwg.mxu0
    %994 = vmatprep.subr.bf16.mxu0 0
    %995 = vmatpush1.bf16.msra.mxu0 %v799
    %996 = vmatprep.subr.bf16.mxu0 0
    %997 = vmatpush1.bf16.msra.mxu0 %v796
    %998 = vmatprep.subr.bf16.mxu0 0
    %999 = vmatpush1.bf16.msra.mxu0 %v793
    %1000 = vmatprep.subr.bf16.mxu0 0
    %1001 = vmatpush1.bf16.msra.mxu0 %v790
    %1002 = vmatprep.subr.bf16.mxu0 0
    %1003 = vmatpush1.bf16.msra.mxu0 %v787
    %1004 = vmatprep.subr.bf16.mxu0 0
    %1005 = vmatpush1.bf16.msra.mxu0 %v784
    %1006 = vmatprep.subr.bf16.mxu0 0
    %1007 = vmatpush1.bf16.msra.mxu0 %v781
    %1008 = vmatprep.subr.bf16.mxu0 0
    %1009 = vmatpush1.bf16.msra.mxu0 %v778
    %1010 = vmatprep.subr.bf16.mxu0 0
    %1011 = vmatpush2.bf16.msra.mxu0 0
    %1012 = vmatprep.subr.bf16.mxu0 0
    %1013 = vmatpush2.bf16.msra.mxu0 0
    %1014 = vmatprep.subr.bf16.mxu0 0
    %1015 = vmatpush2.bf16.msra.mxu0 0
    %1016 = vmatprep.subr.bf16.mxu0 0
    %1017 = vmatpush2.bf16.msra.mxu0 0
    %1018 = vmatprep.subr.bf16.mxu0 0
    %1019 = vmatpush2.bf16.msra.mxu0 0
    %1020 = vmatprep.subr.bf16.mxu0 0
    %1021 = vmatpush2.bf16.msra.mxu0 0
    %1022 = vmatprep.subr.bf16.mxu0 0
    %1023 = vmatpush2.bf16.msra.mxu0 0
    %1024 = vmatprep.subr.bf16.mxu0 0
    %1025 = vmatpush2.bf16.msra.mxu0 0
    %1026 = vmatprep.mubr.bf16.mxu0 0
    %1027 = vmatmul.mubr.bf16.gmra.mxu0 %v374
    %v1028 = vpop.f32.mrf.mxu0
    %v1029 = vadd.f32 %v989, %v1028
    %v1030 = vpop.f32.mrf.mxu0
    %v1031 = vpop.f32.mrf.mxu0
    %v1032 = vpop.f32.mrf.mxu0
    %1033 = vdwg.mxu0
    %1034 = vst [vmem:[#allocation10] sm:$0xff] %v948
    %1035 = vst [vmem:[#allocation10 + $0x8] sm:$0xff] %v950
    %1036 = vst [vmem:[#allocation10 + $0x10] sm:$0xff] %v1029
    // Predicated region
    $region38: #{tpu_custom_call.1} parent=1 // pred_check
      _
    $region39: #{tpu_custom_call.1} parent=1 // pred_check_branch
      %1038 = sbr.rel (0) target = $region41
    $region40: #{tpu_custom_call.1} parent=1 // pred_region
      %s1040 = ssub.s32 384, 384
      %1041 = vsyncadd [#allocation4], %s1040
      %s1043 = sshll.u32 [#allocation10], 4
      %s1044 = int_to_ptr.vmem [resolvable:$true] %s1043
      %1046 = dma.vmem_to_hbm [thread:$0]  %s1044, 384, %s5, [#allocation4]
    $region41: #{tpu_custom_call.1} parent=1 // pred_fallthru
      _
    // Predicated region
    $region42: #{tpu_custom_call.1} parent=1 // pred_check
      _
    $region43: #{tpu_custom_call.1} parent=1 // pred_check_branch
      %1048 = sbr.rel (0) target = $region45
    $region44: #{tpu_custom_call.1} parent=1 // pred_region
      %1049 = dma.done [#allocation4], 384
    $region45: #{tpu_custom_call.1} parent=1 // pred_fallthru
      _
    %1050 = vsyncpa [#allocation3], 1
    %1051 = vsyncpa [#allocation6], 1
    %1052 = vsyncpa [#allocation9], 1
    %1053 = vsyncpa [#allocation4], 1

</llo_original>
